<compile_context>
chip_gen: v7x
topology: tpu7x:2x2x1
jax: 0.10.0
libtpu: 0.0.40
codegen_flags: <defaults>
</compile_context>

<pallas_src>
import jax
import jax.numpy as jnp
import numpy as np
from jax.experimental import pallas as pl
from jax.experimental.pallas import tpu as pltpu

LEAK = 0.2  # LeakyReLU negative slope


def _lrelu(x):
    return jnp.where(x > 0, x, LEAK * x)


def _round_up(x, m):
    return (x + m - 1) // m * m


def _block_diag(a, b):
    ra, ca = a.shape
    rb, cb = b.shape
    top = jnp.concatenate([a, jnp.zeros((ra, cb), a.dtype)], axis=1)
    bot = jnp.concatenate([jnp.zeros((rb, ca), b.dtype), b], axis=1)
    return jnp.concatenate([top, bot], axis=0)


# ----------------------------------- kernel -----------------------------------
def fused_discriminator_kernel(
        xmix_ref, comp_ref,
        # merged dist+prop trunk (block-diagonal), weights bf16 / biases f32
        w1m, b1m, w2m, b2m, w3m, b3m, w4m,
        # conditional-component branch
        cw1f, clab, cw2, cb2, cw3, cb3, cw4,
        bout,
        o_ref):
    f32 = jnp.float32
    bf = lambda x: x.astype(jnp.bfloat16)

    # ---- merged distribution + proportion trunk (block-diagonal weights) ----
    h = _lrelu(jnp.dot(bf(xmix_ref[...]), w1m[...], preferred_element_type=f32) + b1m[...])
    h = _lrelu(jnp.dot(bf(h), w2m[...], preferred_element_type=f32) + b2m[...])
    h = _lrelu(jnp.dot(bf(h), w3m[...], preferred_element_type=f32) + b3m[...])
    # Head as a transposed matmul -> lane-dense (8, tb) scores (dist+prop, pre-scaled by 1/3).
    s_mix = jnp.dot(w4m[...], bf(h).T, preferred_element_type=f32)          # (8, tb)

    # ---- conditional component branch, all components stacked along M ----
    n_comp, tb, n_classes = comp_ref.shape
    xc = bf(comp_ref[...].reshape(n_comp * tb, n_classes))                  # (n_comp*tb, n_cls)
    hc = jnp.dot(xc, cw1f[...], preferred_element_type=f32)                 # (n_comp*tb, 4nf)
    # folded one-hot label row + first-layer bias, per component
    hc = _lrelu(hc.reshape(n_comp, tb, -1) + clab[...])
    hc = hc.reshape(n_comp * tb, -1)
    hc = _lrelu(jnp.dot(bf(hc), cw2[...], preferred_element_type=f32) + cb2[...])
    hc = _lrelu(jnp.dot(bf(hc), cw3[...], preferred_element_type=f32) + cb3[...])
    # Final Linear is linear -> average hidden features over components BEFORE the head.
    nf = hc.shape[-1]
    hc3 = hc.reshape(n_comp, tb, nf)
    hm = hc3[0]
    for j in range(1, n_comp):          # n_comp is a small compile-time constant
        hm = hm + hc3[j]
    hm = hm * (1.0 / n_comp)
    s_comp = jnp.dot(cw4[...], bf(hm).T, preferred_element_type=f32)        # (8, tb)

    # bout = (db4 + pb4 + cb4) / 3 ; head weights already carry the 1/3 factor.
    o_ref[...] = (s_mix + s_comp + bout[...]).astype(o_ref.dtype)


# ----------------------------------- wrapper -----------------------------------
def pack_params(params, n_components):
    """Pre-pack / fuse parameters (block-diagonal merge, one-hot folding, bf16 cast)."""
    (dw1, db1), (dw2, db2), (dw3, db3), (dw4, db4) = params["dist"]
    (pw1, pb1), (pw2, pb2), (pw3, pb3), (pw4, pb4) = params["prop"]
    (cw1, cb1), (cw2, cb2), (cw3, cb3), (cw4, cb4) = params["comp"]
    bf16 = jnp.bfloat16

    w1m = _block_diag(dw1, pw1)                       # (n_cls+n_comp, 8nf)
    b1m = jnp.concatenate([db1, pb1], axis=1)         # (1, 8nf)
    w2m = _block_diag(dw2, pw2)                       # (8nf, 4nf)
    b2m = jnp.concatenate([db2, pb2], axis=1)
    w3m = _block_diag(dw3, pw3)                       # (4nf, 2nf)
    b3m = jnp.concatenate([db3, pb3], axis=1)
    w4m_vec = jnp.concatenate([dw4[:, 0], pw4[:, 0]]) / 3.0      # (2nf,)  (1/3 folded in)
    w4m = jnp.broadcast_to(w4m_vec[None, :], (8, w4m_vec.shape[0]))

    cw1_feat = cw1[n_components:, :]                              # (n_cls, 4nf)
    clab = (cw1[:n_components, :] + cb1)[:, None, :]              # (n_comp, 1, 4nf) f32
    cw4_vec = cw4[:, 0] / 3.0
    cw4_8 = jnp.broadcast_to(cw4_vec[None, :], (8, cw4_vec.shape[0]))

    bout = (db4 + pb4 + cb4) / 3.0                                # (1, 1)

    return dict(
        w1m=w1m.astype(bf16), b1m=b1m, w2m=w2m.astype(bf16), b2m=b2m,
        w3m=w3m.astype(bf16), b3m=b3m, w4m=w4m.astype(bf16),
        cw1=cw1_feat.astype(bf16), clab=clab, cw2=cw2.astype(bf16), cb2=cb2,
        cw3=cw3.astype(bf16), cb3=cb3, cw4=cw4_8.astype(bf16), bout=bout,
    )


def _choose_tiling(B, tb):
    Bp8 = _round_up(B, 8)
    if Bp8 <= tb:
        # Single tile: no forced split (v5e/v6e have one TC; splitting only adds step overhead).
        return Bp8, Bp8
    # Multi-tile: even number of tiles (v7x megacore balance), 128-aligned lane-dense output.
    n_tiles = _round_up(pl.cdiv(Bp8, tb), 2)
    tb_eff = _round_up(pl.cdiv(Bp8, n_tiles), 128)
    Bp = _round_up(Bp8, tb_eff)
    return tb_eff, Bp


def mlp_discriminator_forward(distributions, proportions, components, packed, tb=1024):
    """Fused Pallas forward. Returns (B, 1) scores."""
    B, n_comp, n_classes = components.shape
    x_mix = jnp.concatenate([distributions, proportions], axis=1)     # (B, n_cls + n_comp)
    comp_t = jnp.transpose(components, (1, 0, 2))                     # (n_comp, B, n_cls)

    tb_eff, Bp = _choose_tiling(B, tb)
    if Bp != B:
        x_mix = jnp.pad(x_mix, ((0, Bp - B), (0, 0)))
        comp_t = jnp.pad(comp_t, ((0, 0), (0, Bp - B), (0, 0)))

    flat = (packed["w1m"], packed["b1m"], packed["w2m"], packed["b2m"],
            packed["w3m"], packed["b3m"], packed["w4m"],
            packed["cw1"], packed["clab"], packed["cw2"], packed["cb2"],
            packed["cw3"], packed["cb3"], packed["cw4"], packed["bout"])

    # All parameters (<100 KB) stay resident in VMEM for every grid step.
    param_specs = [pl.BlockSpec(p.shape, lambda i, nd=p.ndim: (0,) * nd) for p in flat]

    grid_spec = pltpu.PrefetchScalarGridSpec(
        num_scalar_prefetch=0,
        grid=(Bp // tb_eff,),
        in_specs=[pl.BlockSpec((tb_eff, x_mix.shape[1]), lambda i: (i, 0)),
                  pl.BlockSpec((n_comp, tb_eff, n_classes), lambda i: (0, i, 0))]
                 + param_specs,
        out_specs=pl.BlockSpec((8, tb_eff), lambda i: (0, i)),
    )

    out = pl.pallas_call(
        fused_discriminator_kernel,
        out_shape=jax.ShapeDtypeStruct((8, Bp), jnp.float32),
        grid_spec=grid_spec,
        compiler_params=pltpu.CompilerParams(dimension_semantics=("parallel",)),
    )(x_mix, comp_t, *flat)

    return out[0, :B][:, None]


# ---------------------------- init (kaiming_normal_-style) ----------------------------
def init_mlp4(key, dims):
    """Weights stored as (in, out) so x @ W == PyTorch x @ weight.T."""
    params = []
    for i in range(4):
        fan_in, fan_out = dims[i], dims[i + 1]
        key, kw, kb = jax.random.split(key, 3)
        std = (2.0 / fan_in) ** 0.5
        w = jax.random.normal(kw, (fan_in, fan_out), jnp.float32) * std
        bound = 1.0 / (fan_in ** 0.5)
        b = jax.random.uniform(kb, (1, fan_out), jnp.float32, -bound, bound)
        params.append((w, b))
    return params, key


def init_mlp_discriminator(key, n_components, n_classes, n_features):
    nf = n_features
    dist_p, key = init_mlp4(key, [n_classes, nf * 4, nf * 2, nf, 1])
    prop_p, key = init_mlp4(key, [n_components, nf * 4, nf * 2, nf, 1])
    comp_p, key = init_mlp4(key, [n_components + n_classes, nf * 4, nf * 2, nf, 1])
    return {"dist": dist_p, "prop": prop_p, "comp": comp_p}


# ---------------------------- plain-JAX f32 reference ----------------------------
def _mlp4_ref(x, params):
    (w1, b1), (w2, b2), (w3, b3), (w4, b4) = params
    h = _lrelu(x @ w1 + b1)
    h = _lrelu(h @ w2 + b2)
    h = _lrelu(h @ w3 + b3)
    return h @ w4 + b4


def _forward_ref(distributions, proportions, components, params):
    B, n_comp, n_classes = components.shape
    d = _mlp4_ref(distributions, params["dist"])
    p = _mlp4_ref(proportions, params["prop"])
    labels = jnp.broadcast_to(jnp.eye(n_comp, dtype=jnp.float32)[None], (B, n_comp, n_comp))
    ci = jnp.concatenate([labels, components], axis=2).reshape(B * n_comp, n_comp + n_classes)
    c = jnp.mean(_mlp4_ref(ci, params["comp"]).reshape(B, n_comp, 1), axis=1)
    return (d + p + c) / 3.0


# TODO(synk): spectral_norm / Dropout / BatchNorm block variants (spectral=True,
# normalize='batch', dropout=True) are not part of the default forward and are not implemented.

if __name__ == "__main__":
    B, n_components, n_classes, n_features = 8, 4, 16, 32

    key = jax.random.PRNGKey(0)
    kd, kp, kc, kparam = jax.random.split(key, 4)
    distributions = jax.random.uniform(kd, (B, n_classes), jnp.float32)
    proportions = jax.random.uniform(kp, (B, n_components), jnp.float32)
    components = jax.random.uniform(kc, (B, n_components, n_classes), jnp.float32)

    params = init_mlp_discriminator(kparam, n_components, n_classes, n_features)
    packed = pack_params(params, n_components)

    fwd = jax.jit(mlp_discriminator_forward, static_argnames=("tb",))

    # small batch (single tile)
    score = jax.block_until_ready(fwd(distributions, proportions, components, packed))
    ref = _forward_ref(distributions, proportions, components, params)
    assert score.shape == (B, 1)
    # bf16 MXU operands (f32 accumulation) -> looser tolerance than the f32 reference.
    np.testing.assert_allclose(np.asarray(score), np.asarray(ref), rtol=5e-2, atol=5e-2)

    # larger, non-multiple batch exercising padding + multi-tile grid
    B2 = 300
    kd2, kp2, kc2 = jax.random.split(jax.random.PRNGKey(1), 3)
    d2 = jax.random.uniform(kd2, (B2, n_classes), jnp.float32)
    p2 = jax.random.uniform(kp2, (B2, n_components), jnp.float32)
    c2 = jax.random.uniform(kc2, (B2, n_components, n_classes), jnp.float32)
    s2 = jax.block_until_ready(fwd(d2, p2, c2, packed, tb=128))
    r2 = _forward_ref(d2, p2, c2, params)
    assert s2.shape == (B2, 1)
    np.testing.assert_allclose(np.asarray(s2), np.asarray(r2), rtol=5e-2, atol=5e-2)

    print("KERNEL_OK")
</pallas_src>

<mosaic_0001>
module attributes {stable_mosaic.version = 11 : i64} {
  func.func @fused_discriminator_kernel(%arg0: i32, %arg1: memref<8x20xf32, #tpu.memory_space<vmem>>, %arg2: memref<4x8x16xf32, #tpu.memory_space<vmem>>, %arg3: memref<20x256xbf16, #tpu.memory_space<vmem>>, %arg4: memref<1x256xf32, #tpu.memory_space<vmem>>, %arg5: memref<256x128xbf16, #tpu.memory_space<vmem>>, %arg6: memref<1x128xf32, #tpu.memory_space<vmem>>, %arg7: memref<128x64xbf16, #tpu.memory_space<vmem>>, %arg8: memref<1x64xf32, #tpu.memory_space<vmem>>, %arg9: memref<8x64xbf16, #tpu.memory_space<vmem>>, %arg10: memref<16x128xbf16, #tpu.memory_space<vmem>>, %arg11: memref<4x1x128xf32, #tpu.memory_space<vmem>>, %arg12: memref<128x64xbf16, #tpu.memory_space<vmem>>, %arg13: memref<1x64xf32, #tpu.memory_space<vmem>>, %arg14: memref<64x32xbf16, #tpu.memory_space<vmem>>, %arg15: memref<1x32xf32, #tpu.memory_space<vmem>>, %arg16: memref<8x32xbf16, #tpu.memory_space<vmem>>, %arg17: memref<1x1xf32, #tpu.memory_space<vmem>>, %arg18: memref<8x8xf32, #tpu.memory_space<vmem>>) attributes {dimension_semantics = [#tpu.dimension_semantics<parallel>], iteration_bounds = array<i64: 1>, scalar_prefetch = 0 : i64, scratch_operands = 0 : i64, tpu.core_type = #tpu.core_type<tc>, window_params = [{transform_indices = @transform_0, window_bounds = array<i64: 8, 20>}, {transform_indices = @transform_1, window_bounds = array<i64: 4, 8, 16>}, {pipeline_mode = #tpu.pipeline_mode<synchronous>, transform_indices = @transform_2, window_bounds = array<i64: 20, 256>}, {pipeline_mode = #tpu.pipeline_mode<synchronous>, transform_indices = @transform_3, window_bounds = array<i64: 1, 256>}, {pipeline_mode = #tpu.pipeline_mode<synchronous>, transform_indices = @transform_4, window_bounds = array<i64: 256, 128>}, {pipeline_mode = #tpu.pipeline_mode<synchronous>, transform_indices = @transform_5, window_bounds = array<i64: 1, 128>}, {pipeline_mode = #tpu.pipeline_mode<synchronous>, transform_indices = @transform_6, window_bounds = array<i64: 128, 64>}, {pipeline_mode = #tpu.pipeline_mode<synchronous>, transform_indices = @transform_7, window_bounds = array<i64: 1, 64>}, {pipeline_mode = #tpu.pipeline_mode<synchronous>, transform_indices = @transform_8, window_bounds = array<i64: 8, 64>}, {pipeline_mode = #tpu.pipeline_mode<synchronous>, transform_indices = @transform_9, window_bounds = array<i64: 16, 128>}, {pipeline_mode = #tpu.pipeline_mode<synchronous>, transform_indices = @transform_10, window_bounds = array<i64: 4, 1, 128>}, {pipeline_mode = #tpu.pipeline_mode<synchronous>, transform_indices = @transform_11, window_bounds = array<i64: 128, 64>}, {pipeline_mode = #tpu.pipeline_mode<synchronous>, transform_indices = @transform_12, window_bounds = array<i64: 1, 64>}, {pipeline_mode = #tpu.pipeline_mode<synchronous>, transform_indices = @transform_13, window_bounds = array<i64: 64, 32>}, {pipeline_mode = #tpu.pipeline_mode<synchronous>, transform_indices = @transform_14, window_bounds = array<i64: 1, 32>}, {pipeline_mode = #tpu.pipeline_mode<synchronous>, transform_indices = @transform_15, window_bounds = array<i64: 8, 32>}, {pipeline_mode = #tpu.pipeline_mode<synchronous>, transform_indices = @transform_16, window_bounds = array<i64: 1, 1>}, {transform_indices = @transform_17, window_bounds = array<i64: 8, 8>}]} {
    %c0 = arith.constant 0 : index
    %c0_0 = arith.constant 0 : index
    %0 = vector.load %arg1[%c0, %c0_0] : memref<8x20xf32, #tpu.memory_space<vmem>>, vector<8x20xf32>
    %1 = arith.truncf %0 : vector<8x20xf32> to vector<8x20xbf16>
    %c0_1 = arith.constant 0 : index
    %c0_2 = arith.constant 0 : index
    %2 = vector.load %arg3[%c0_1, %c0_2] : memref<20x256xbf16, #tpu.memory_space<vmem>>, vector<20x256xbf16>
    %cst = arith.constant dense<0.000000e+00> : vector<8x256xf32>
    %3 = tpu.matmul %1, %2, %cst {dimension_numbers = #tpu.dot_dimension_numbers<[1], [0], [0], [1], [0, 0, 1, 1], [], []>} : vector<8x20xbf16>, vector<20x256xbf16>, vector<8x256xf32> -> vector<8x256xf32>
    %c0_3 = arith.constant 0 : index
    %c0_4 = arith.constant 0 : index
    %4 = vector.load %arg4[%c0_3, %c0_4] : memref<1x256xf32, #tpu.memory_space<vmem>>, vector<1x256xf32>
    %5 = vector.broadcast %4 : vector<1x256xf32> to vector<8x256xf32>
    %6 = arith.addf %3, %5 : vector<8x256xf32>
    %cst_5 = arith.constant 0.000000e+00 : f32
    %7 = vector.broadcast %cst_5 : f32 to vector<8x256xf32>
    %8 = arith.cmpf ogt, %6, %7 : vector<8x256xf32>
    %cst_6 = arith.constant 2.000000e-01 : f32
    %9 = vector.broadcast %cst_6 : f32 to vector<8x256xf32>
    %10 = arith.mulf %9, %6 : vector<8x256xf32>
    %11 = arith.select %8, %6, %10 : vector<8x256xi1>, vector<8x256xf32>
    %12 = arith.truncf %11 : vector<8x256xf32> to vector<8x256xbf16>
    %c0_7 = arith.constant 0 : index
    %c0_8 = arith.constant 0 : index
    %13 = vector.load %arg5[%c0_7, %c0_8] : memref<256x128xbf16, #tpu.memory_space<vmem>>, vector<256x128xbf16>
    %cst_9 = arith.constant dense<0.000000e+00> : vector<8x128xf32>
    %14 = tpu.matmul %12, %13, %cst_9 {dimension_numbers = #tpu.dot_dimension_numbers<[1], [0], [0], [1], [0, 0, 1, 1], [], []>} : vector<8x256xbf16>, vector<256x128xbf16>, vector<8x128xf32> -> vector<8x128xf32>
    %c0_10 = arith.constant 0 : index
    %c0_11 = arith.constant 0 : index
    %15 = vector.load %arg6[%c0_10, %c0_11] : memref<1x128xf32, #tpu.memory_space<vmem>>, vector<1x128xf32>
    %16 = vector.broadcast %15 : vector<1x128xf32> to vector<8x128xf32>
    %17 = arith.addf %14, %16 : vector<8x128xf32>
    %cst_12 = arith.constant 0.000000e+00 : f32
    %18 = vector.broadcast %cst_12 : f32 to vector<8x128xf32>
    %19 = arith.cmpf ogt, %17, %18 : vector<8x128xf32>
    %cst_13 = arith.constant 2.000000e-01 : f32
    %20 = vector.broadcast %cst_13 : f32 to vector<8x128xf32>
    %21 = arith.mulf %20, %17 : vector<8x128xf32>
    %22 = arith.select %19, %17, %21 : vector<8x128xi1>, vector<8x128xf32>
    %23 = arith.truncf %22 : vector<8x128xf32> to vector<8x128xbf16>
    %c0_14 = arith.constant 0 : index
    %c0_15 = arith.constant 0 : index
    %24 = vector.load %arg7[%c0_14, %c0_15] : memref<128x64xbf16, #tpu.memory_space<vmem>>, vector<128x64xbf16>
    %cst_16 = arith.constant dense<0.000000e+00> : vector<8x64xf32>
    %25 = tpu.matmul %23, %24, %cst_16 {dimension_numbers = #tpu.dot_dimension_numbers<[1], [0], [0], [1], [0, 0, 1, 1], [], []>} : vector<8x128xbf16>, vector<128x64xbf16>, vector<8x64xf32> -> vector<8x64xf32>
    %c0_17 = arith.constant 0 : index
    %c0_18 = arith.constant 0 : index
    %26 = vector.load %arg8[%c0_17, %c0_18] : memref<1x64xf32, #tpu.memory_space<vmem>>, vector<1x64xf32>
    %27 = vector.broadcast %26 : vector<1x64xf32> to vector<8x64xf32>
    %28 = arith.addf %25, %27 : vector<8x64xf32>
    %cst_19 = arith.constant 0.000000e+00 : f32
    %29 = vector.broadcast %cst_19 : f32 to vector<8x64xf32>
    %30 = arith.cmpf ogt, %28, %29 : vector<8x64xf32>
    %cst_20 = arith.constant 2.000000e-01 : f32
    %31 = vector.broadcast %cst_20 : f32 to vector<8x64xf32>
    %32 = arith.mulf %31, %28 : vector<8x64xf32>
    %33 = arith.select %30, %28, %32 : vector<8x64xi1>, vector<8x64xf32>
    %c0_21 = arith.constant 0 : index
    %c0_22 = arith.constant 0 : index
    %34 = vector.load %arg9[%c0_21, %c0_22] : memref<8x64xbf16, #tpu.memory_space<vmem>>, vector<8x64xbf16>
    %35 = arith.truncf %33 : vector<8x64xf32> to vector<8x64xbf16>
    %36 = tpu.transpose %35, [1, 0] : vector<8x64xbf16> -> vector<64x8xbf16>
    %cst_23 = arith.constant dense<0.000000e+00> : vector<8x8xf32>
    %37 = tpu.matmul %34, %36, %cst_23 {dimension_numbers = #tpu.dot_dimension_numbers<[1], [0], [0], [1], [0, 0, 1, 1], [], []>} : vector<8x64xbf16>, vector<64x8xbf16>, vector<8x8xf32> -> vector<8x8xf32>
    %c0_24 = arith.constant 0 : index
    %c0_25 = arith.constant 0 : index
    %c0_26 = arith.constant 0 : index
    %38 = vector.load %arg2[%c0_24, %c0_25, %c0_26] : memref<4x8x16xf32, #tpu.memory_space<vmem>>, vector<4x8x16xf32>
    %39 = vector.shape_cast %38 : vector<4x8x16xf32> to vector<32x16xf32>
    %40 = arith.truncf %39 : vector<32x16xf32> to vector<32x16xbf16>
    %c0_27 = arith.constant 0 : index
    %c0_28 = arith.constant 0 : index
    %41 = vector.load %arg10[%c0_27, %c0_28] : memref<16x128xbf16, #tpu.memory_space<vmem>>, vector<16x128xbf16>
    %cst_29 = arith.constant dense<0.000000e+00> : vector<32x128xf32>
    %42 = tpu.matmul %40, %41, %cst_29 {dimension_numbers = #tpu.dot_dimension_numbers<[1], [0], [0], [1], [0, 0, 1, 1], [], []>} : vector<32x16xbf16>, vector<16x128xbf16>, vector<32x128xf32> -> vector<32x128xf32>
    %43 = vector.shape_cast %42 : vector<32x128xf32> to vector<4x8x128xf32>
    %c0_30 = arith.constant 0 : index
    %c0_31 = arith.constant 0 : index
    %c0_32 = arith.constant 0 : index
    %44 = vector.load %arg11[%c0_30, %c0_31, %c0_32] : memref<4x1x128xf32, #tpu.memory_space<vmem>>, vector<4x1x128xf32>
    %45 = vector.broadcast %44 : vector<4x1x128xf32> to vector<4x8x128xf32>
    %46 = arith.addf %43, %45 : vector<4x8x128xf32>
    %cst_33 = arith.constant 0.000000e+00 : f32
    %47 = vector.broadcast %cst_33 : f32 to vector<4x8x128xf32>
    %48 = arith.cmpf ogt, %46, %47 : vector<4x8x128xf32>
    %cst_34 = arith.constant 2.000000e-01 : f32
    %49 = vector.broadcast %cst_34 : f32 to vector<4x8x128xf32>
    %50 = arith.mulf %49, %46 : vector<4x8x128xf32>
    %51 = arith.select %48, %46, %50 : vector<4x8x128xi1>, vector<4x8x128xf32>
    %52 = vector.shape_cast %51 : vector<4x8x128xf32> to vector<32x128xf32>
    %53 = arith.truncf %52 : vector<32x128xf32> to vector<32x128xbf16>
    %c0_35 = arith.constant 0 : index
    %c0_36 = arith.constant 0 : index
    %54 = vector.load %arg12[%c0_35, %c0_36] : memref<128x64xbf16, #tpu.memory_space<vmem>>, vector<128x64xbf16>
    %cst_37 = arith.constant dense<0.000000e+00> : vector<32x64xf32>
    %55 = tpu.matmul %53, %54, %cst_37 {dimension_numbers = #tpu.dot_dimension_numbers<[1], [0], [0], [1], [0, 0, 1, 1], [], []>} : vector<32x128xbf16>, vector<128x64xbf16>, vector<32x64xf32> -> vector<32x64xf32>
    %c0_38 = arith.constant 0 : index
    %c0_39 = arith.constant 0 : index
    %56 = vector.load %arg13[%c0_38, %c0_39] : memref<1x64xf32, #tpu.memory_space<vmem>>, vector<1x64xf32>
    %57 = vector.broadcast %56 : vector<1x64xf32> to vector<32x64xf32>
    %58 = arith.addf %55, %57 : vector<32x64xf32>
    %cst_40 = arith.constant 0.000000e+00 : f32
    %59 = vector.broadcast %cst_40 : f32 to vector<32x64xf32>
    %60 = arith.cmpf ogt, %58, %59 : vector<32x64xf32>
    %cst_41 = arith.constant 2.000000e-01 : f32
    %61 = vector.broadcast %cst_41 : f32 to vector<32x64xf32>
    %62 = arith.mulf %61, %58 : vector<32x64xf32>
    %63 = arith.select %60, %58, %62 : vector<32x64xi1>, vector<32x64xf32>
    %64 = arith.truncf %63 : vector<32x64xf32> to vector<32x64xbf16>
    %c0_42 = arith.constant 0 : index
    %c0_43 = arith.constant 0 : index
    %65 = vector.load %arg14[%c0_42, %c0_43] : memref<64x32xbf16, #tpu.memory_space<vmem>>, vector<64x32xbf16>
    %cst_44 = arith.constant dense<0.000000e+00> : vector<32x32xf32>
    %66 = tpu.matmul %64, %65, %cst_44 {dimension_numbers = #tpu.dot_dimension_numbers<[1], [0], [0], [1], [0, 0, 1, 1], [], []>} : vector<32x64xbf16>, vector<64x32xbf16>, vector<32x32xf32> -> vector<32x32xf32>
    %c0_45 = arith.constant 0 : index
    %c0_46 = arith.constant 0 : index
    %67 = vector.load %arg15[%c0_45, %c0_46] : memref<1x32xf32, #tpu.memory_space<vmem>>, vector<1x32xf32>
    %68 = vector.broadcast %67 : vector<1x32xf32> to vector<32x32xf32>
    %69 = arith.addf %66, %68 : vector<32x32xf32>
    %cst_47 = arith.constant 0.000000e+00 : f32
    %70 = vector.broadcast %cst_47 : f32 to vector<32x32xf32>
    %71 = arith.cmpf ogt, %69, %70 : vector<32x32xf32>
    %cst_48 = arith.constant 2.000000e-01 : f32
    %72 = vector.broadcast %cst_48 : f32 to vector<32x32xf32>
    %73 = arith.mulf %72, %69 : vector<32x32xf32>
    %74 = arith.select %71, %69, %73 : vector<32x32xi1>, vector<32x32xf32>
    %75 = vector.shape_cast %74 : vector<32x32xf32> to vector<4x8x32xf32>
    %76 = vector.extract_strided_slice %75 {offsets = [0, 0, 0], sizes = [1, 8, 32], strides = [1, 1, 1]} : vector<4x8x32xf32> to vector<1x8x32xf32>
    %77 = vector.shape_cast %76 : vector<1x8x32xf32> to vector<8x32xf32>
    %78 = vector.extract_strided_slice %75 {offsets = [1, 0, 0], sizes = [1, 8, 32], strides = [1, 1, 1]} : vector<4x8x32xf32> to vector<1x8x32xf32>
    %79 = vector.shape_cast %78 : vector<1x8x32xf32> to vector<8x32xf32>
    %80 = arith.addf %77, %79 : vector<8x32xf32>
    %81 = vector.extract_strided_slice %75 {offsets = [2, 0, 0], sizes = [1, 8, 32], strides = [1, 1, 1]} : vector<4x8x32xf32> to vector<1x8x32xf32>
    %82 = vector.shape_cast %81 : vector<1x8x32xf32> to vector<8x32xf32>
    %83 = arith.addf %80, %82 : vector<8x32xf32>
    %84 = vector.extract_strided_slice %75 {offsets = [3, 0, 0], sizes = [1, 8, 32], strides = [1, 1, 1]} : vector<4x8x32xf32> to vector<1x8x32xf32>
    %85 = vector.shape_cast %84 : vector<1x8x32xf32> to vector<8x32xf32>
    %86 = arith.addf %83, %85 : vector<8x32xf32>
    %cst_49 = arith.constant 2.500000e-01 : f32
    %87 = vector.broadcast %cst_49 : f32 to vector<8x32xf32>
    %88 = arith.mulf %86, %87 : vector<8x32xf32>
    %c0_50 = arith.constant 0 : index
    %c0_51 = arith.constant 0 : index
    %89 = vector.load %arg16[%c0_50, %c0_51] : memref<8x32xbf16, #tpu.memory_space<vmem>>, vector<8x32xbf16>
    %90 = arith.truncf %88 : vector<8x32xf32> to vector<8x32xbf16>
    %91 = tpu.transpose %90, [1, 0] : vector<8x32xbf16> -> vector<32x8xbf16>
    %cst_52 = arith.constant dense<0.000000e+00> : vector<8x8xf32>
    %92 = tpu.matmul %89, %91, %cst_52 {dimension_numbers = #tpu.dot_dimension_numbers<[1], [0], [0], [1], [0, 0, 1, 1], [], []>} : vector<8x32xbf16>, vector<32x8xbf16>, vector<8x8xf32> -> vector<8x8xf32>
    %93 = arith.addf %37, %92 : vector<8x8xf32>
    %c0_53 = arith.constant 0 : index
    %c0_54 = arith.constant 0 : index
    %94 = vector.load %arg17[%c0_53, %c0_54] : memref<1x1xf32, #tpu.memory_space<vmem>>, vector<1x1xf32>
    %95 = vector.broadcast %94 : vector<1x1xf32> to vector<8x8xf32>
    %96 = arith.addf %93, %95 : vector<8x8xf32>
    %c0_55 = arith.constant 0 : index
    %c0_56 = arith.constant 0 : index
    %97 = vector.load %arg18[%c0_55, %c0_56] : memref<8x8xf32, #tpu.memory_space<vmem>>, vector<8x8xf32>
    tpu.vector_store %arg18[%c0_55, %c0_56], %96 {strides = array<i32>} : memref<8x8xf32, #tpu.memory_space<vmem>>, vector<8x8xf32>,
    return
  }
  func.func @transform_0(%arg0: i32) -> (i32, i32) {
    %c0_i32 = arith.constant 0 : i32
    %c0_i32_0 = arith.constant 0 : i32
    return %arg0, %c0_i32 : i32, i32
  }
  func.func @transform_1(%arg0: i32) -> (i32, i32, i32) {
    %c0_i32 = arith.constant 0 : i32
    %c0_i32_0 = arith.constant 0 : i32
    %c0_i32_1 = arith.constant 0 : i32
    return %c0_i32, %arg0, %c0_i32_0 : i32, i32, i32
  }
  func.func @transform_2(%arg0: i32) -> (i32, i32) {
    %c0_i32 = arith.constant 0 : i32
    %c0_i32_0 = arith.constant 0 : i32
    %c0_i32_1 = arith.constant 0 : i32
    return %c0_i32, %c0_i32_0 : i32, i32
  }
  func.func @transform_3(%arg0: i32) -> (i32, i32) {
    %c0_i32 = arith.constant 0 : i32
    %c0_i32_0 = arith.constant 0 : i32
    %c0_i32_1 = arith.constant 0 : i32
    return %c0_i32, %c0_i32_0 : i32, i32
  }
  func.func @transform_4(%arg0: i32) -> (i32, i32) {
    %c0_i32 = arith.constant 0 : i32
    %c0_i32_0 = arith.constant 0 : i32
    %c0_i32_1 = arith.constant 0 : i32
    return %c0_i32, %c0_i32_0 : i32, i32
  }
  func.func @transform_5(%arg0: i32) -> (i32, i32) {
    %c0_i32 = arith.constant 0 : i32
    %c0_i32_0 = arith.constant 0 : i32
    %c0_i32_1 = arith.constant 0 : i32
    return %c0_i32, %c0_i32_0 : i32, i32
  }
  func.func @transform_6(%arg0: i32) -> (i32, i32) {
    %c0_i32 = arith.constant 0 : i32
    %c0_i32_0 = arith.constant 0 : i32
    %c0_i32_1 = arith.constant 0 : i32
    return %c0_i32, %c0_i32_0 : i32, i32
  }
  func.func @transform_7(%arg0: i32) -> (i32, i32) {
    %c0_i32 = arith.constant 0 : i32
    %c0_i32_0 = arith.constant 0 : i32
    %c0_i32_1 = arith.constant 0 : i32
    return %c0_i32, %c0_i32_0 : i32, i32
  }
  func.func @transform_8(%arg0: i32) -> (i32, i32) {
    %c0_i32 = arith.constant 0 : i32
    %c0_i32_0 = arith.constant 0 : i32
    %c0_i32_1 = arith.constant 0 : i32
    return %c0_i32, %c0_i32_0 : i32, i32
  }
  func.func @transform_9(%arg0: i32) -> (i32, i32) {
    %c0_i32 = arith.constant 0 : i32
    %c0_i32_0 = arith.constant 0 : i32
    %c0_i32_1 = arith.constant 0 : i32
    return %c0_i32, %c0_i32_0 : i32, i32
  }
  func.func @transform_10(%arg0: i32) -> (i32, i32, i32) {
    %c0_i32 = arith.constant 0 : i32
    %c0_i32_0 = arith.constant 0 : i32
    %c0_i32_1 = arith.constant 0 : i32
    %c0_i32_2 = arith.constant 0 : i32
    return %c0_i32, %c0_i32_0, %c0_i32_1 : i32, i32, i32
  }
  func.func @transform_11(%arg0: i32) -> (i32, i32) {
    %c0_i32 = arith.constant 0 : i32
    %c0_i32_0 = arith.constant 0 : i32
    %c0_i32_1 = arith.constant 0 : i32
    return %c0_i32, %c0_i32_0 : i32, i32
  }
  func.func @transform_12(%arg0: i32) -> (i32, i32) {
    %c0_i32 = arith.constant 0 : i32
    %c0_i32_0 = arith.constant 0 : i32
    %c0_i32_1 = arith.constant 0 : i32
    return %c0_i32, %c0_i32_0 : i32, i32
  }
  func.func @transform_13(%arg0: i32) -> (i32, i32) {
    %c0_i32 = arith.constant 0 : i32
    %c0_i32_0 = arith.constant 0 : i32
    %c0_i32_1 = arith.constant 0 : i32
    return %c0_i32, %c0_i32_0 : i32, i32
  }
  func.func @transform_14(%arg0: i32) -> (i32, i32) {
    %c0_i32 = arith.constant 0 : i32
    %c0_i32_0 = arith.constant 0 : i32
    %c0_i32_1 = arith.constant 0 : i32
    return %c0_i32, %c0_i32_0 : i32, i32
  }
  func.func @transform_15(%arg0: i32) -> (i32, i32) {
    %c0_i32 = arith.constant 0 : i32
    %c0_i32_0 = arith.constant 0 : i32
    %c0_i32_1 = arith.constant 0 : i32
    return %c0_i32, %c0_i32_0 : i32, i32
  }
  func.func @transform_16(%arg0: i32) -> (i32, i32) {
    %c0_i32 = arith.constant 0 : i32
    %c0_i32_0 = arith.constant 0 : i32
    %c0_i32_1 = arith.constant 0 : i32
    return %c0_i32, %c0_i32_0 : i32, i32
  }
  func.func @transform_17(%arg0: i32) -> (i32, i32) {
    %c0_i32 = arith.constant 0 : i32
    %c0_i32_0 = arith.constant 0 : i32
    return %c0_i32, %arg0 : i32, i32
  }
}

</mosaic_0001>

<llo_original>
// kernel: mlp_discriminator_forward.1
$region0: #{mlp_discriminator_forward.1}
  #allocation0 [shape = 'u32[]', space=smem, size = 0x4, offset = 0x4, fixed_abs, tag = 'smem constant byte address 0x4 - core index']
  #allocation1 [shape = 'u32[144,128]{1,0:T(1,128)}', space=vmem, size = 0x12000, scoped, tag = 'internal scratch']
  #allocation2 [shape = 'f32[1,1]{1,0:T(1,128)S(1)}', space=vmem, size = 0x200, scoped, tag = 'scoped memory for mlp_discriminator_forward.1']
  %s0 = inlined_call_operand.vmem [shape: f32[8,20], index: 0, kind: input, shape index: {}]
  %s1 = inlined_call_operand.vmem [shape: f32[4,8,16], index: 1, kind: input, shape index: {}]
  %s2 = inlined_call_operand.vmem [shape: bf16[20,256], index: 2, kind: input, shape index: {}]
  %s3 = inlined_call_operand.vmem [shape: f32[1,256], index: 3, kind: input, shape index: {}]
  %s4 = inlined_call_operand.vmem [shape: bf16[256,128], index: 4, kind: input, shape index: {}]
  %s5 = inlined_call_operand.vmem [shape: f32[1,128], index: 5, kind: input, shape index: {}]
  %s6 = inlined_call_operand.vmem [shape: bf16[128,64], index: 6, kind: input, shape index: {}]
  %s7 = inlined_call_operand.vmem [shape: f32[1,64], index: 7, kind: input, shape index: {}]
  %s8 = inlined_call_operand.vmem [shape: bf16[8,64], index: 8, kind: input, shape index: {}]
  %s9 = inlined_call_operand.vmem [shape: bf16[16,128], index: 9, kind: input, shape index: {}]
  %s10 = inlined_call_operand.vmem [shape: f32[4,1,128], index: 10, kind: input, shape index: {}]
  %s11 = inlined_call_operand.vmem [shape: bf16[128,64], index: 11, kind: input, shape index: {}]
  %s12 = inlined_call_operand.vmem [shape: f32[1,64], index: 12, kind: input, shape index: {}]
  %s13 = inlined_call_operand.vmem [shape: bf16[64,32], index: 13, kind: input, shape index: {}]
  %s14 = inlined_call_operand.vmem [shape: f32[1,32], index: 14, kind: input, shape index: {}]
  %s15 = inlined_call_operand.vmem [shape: bf16[8,32], index: 15, kind: input, shape index: {}]
  %s16 = inlined_call_operand.<no memory space> [shape: f32[1,1], index: 16, kind: input, shape index: {}]
  %s17 = inlined_call_operand.vmem [shape: f32[8,8], index: 17, kind: output, shape index: {}]
  %s18 = sld [smem:[#allocation0]]
  $region78: #{mlp_discriminator_forward.1} parent=0
    _
  %s20 = ssub.s32 1, %s18
  %s21 = scalar_select 0, %s20, %s18
  %v22 = vstv %s16
  %23 = vst [vmem:[#allocation2] sm:$0x1] %v22
  // Predicated region
  $region2: #{mlp_discriminator_forward.1} parent=0 // pred_check
    _
  $region3: #{mlp_discriminator_forward.1} parent=0 // pred_check_branch
    %25 = sbr.rel (0) target = $region5
  $region4: #{mlp_discriminator_forward.1} parent=0 // pred_region
    _
  $region5: #{mlp_discriminator_forward.1} parent=0 // pred_fallthru
    _
  // Predicated region
  $region6: #{mlp_discriminator_forward.1} parent=0 // pred_check
    _
  $region7: #{mlp_discriminator_forward.1} parent=0 // pred_check_branch
    %27 = sbr.rel (0) target = $region9
  $region8: #{mlp_discriminator_forward.1} parent=0 // pred_region
    _
  $region9: #{mlp_discriminator_forward.1} parent=0 // pred_fallthru
    _
  // Predicated region
  $region10: #{mlp_discriminator_forward.1} parent=0 // pred_check
    _
  $region11: #{mlp_discriminator_forward.1} parent=0 // pred_check_branch
    %29 = sbr.rel (0) target = $region13
  $region12: #{mlp_discriminator_forward.1} parent=0 // pred_region
    _
  $region13: #{mlp_discriminator_forward.1} parent=0 // pred_fallthru
    _
  // Predicated region
  $region14: #{mlp_discriminator_forward.1} parent=0 // pred_check
    _
  $region15: #{mlp_discriminator_forward.1} parent=0 // pred_check_branch
    %31 = sbr.rel (0) target = $region17
  $region16: #{mlp_discriminator_forward.1} parent=0 // pred_region
    _
  $region17: #{mlp_discriminator_forward.1} parent=0 // pred_fallthru
    _
  // Predicated region
  $region18: #{mlp_discriminator_forward.1} parent=0 // pred_check
    _
  $region19: #{mlp_discriminator_forward.1} parent=0 // pred_check_branch
    %33 = sbr.rel (0) target = $region21
  $region20: #{mlp_discriminator_forward.1} parent=0 // pred_region
    _
  $region21: #{mlp_discriminator_forward.1} parent=0 // pred_fallthru
    _
  // Predicated region
  $region22: #{mlp_discriminator_forward.1} parent=0 // pred_check
    _
  $region23: #{mlp_discriminator_forward.1} parent=0 // pred_check_branch
    %35 = sbr.rel (0) target = $region25
  $region24: #{mlp_discriminator_forward.1} parent=0 // pred_region
    _
  $region25: #{mlp_discriminator_forward.1} parent=0 // pred_fallthru
    _
  // Predicated region
  $region26: #{mlp_discriminator_forward.1} parent=0 // pred_check
    _
  $region27: #{mlp_discriminator_forward.1} parent=0 // pred_check_branch
    %37 = sbr.rel (0) target = $region29
  $region28: #{mlp_discriminator_forward.1} parent=0 // pred_region
    _
  $region29: #{mlp_discriminator_forward.1} parent=0 // pred_fallthru
    _
  // Predicated region
  $region30: #{mlp_discriminator_forward.1} parent=0 // pred_check
    _
  $region31: #{mlp_discriminator_forward.1} parent=0 // pred_check_branch
    %39 = sbr.rel (0) target = $region33
  $region32: #{mlp_discriminator_forward.1} parent=0 // pred_region
    _
  $region33: #{mlp_discriminator_forward.1} parent=0 // pred_fallthru
    _
  // Predicated region
  $region34: #{mlp_discriminator_forward.1} parent=0 // pred_check
    _
  $region35: #{mlp_discriminator_forward.1} parent=0 // pred_check_branch
    %41 = sbr.rel (0) target = $region37
  $region36: #{mlp_discriminator_forward.1} parent=0 // pred_region
    _
  $region37: #{mlp_discriminator_forward.1} parent=0 // pred_fallthru
    _
  // Predicated region
  $region38: #{mlp_discriminator_forward.1} parent=0 // pred_check
    _
  $region39: #{mlp_discriminator_forward.1} parent=0 // pred_check_branch
    %43 = sbr.rel (0) target = $region41
  $region40: #{mlp_discriminator_forward.1} parent=0 // pred_region
    _
  $region41: #{mlp_discriminator_forward.1} parent=0 // pred_fallthru
    _
  // Predicated region
  $region42: #{mlp_discriminator_forward.1} parent=0 // pred_check
    _
  $region43: #{mlp_discriminator_forward.1} parent=0 // pred_check_branch
    %45 = sbr.rel (0) target = $region45
  $region44: #{mlp_discriminator_forward.1} parent=0 // pred_region
    _
  $region45: #{mlp_discriminator_forward.1} parent=0 // pred_fallthru
    _
  // Predicated region
  $region46: #{mlp_discriminator_forward.1} parent=0 // pred_check
    _
  $region47: #{mlp_discriminator_forward.1} parent=0 // pred_check_branch
    %47 = sbr.rel (0) target = $region49
  $region48: #{mlp_discriminator_forward.1} parent=0 // pred_region
    _
  $region49: #{mlp_discriminator_forward.1} parent=0 // pred_fallthru
    _
  // Predicated region
  $region50: #{mlp_discriminator_forward.1} parent=0 // pred_check
    _
  $region51: #{mlp_discriminator_forward.1} parent=0 // pred_check_branch
    %49 = sbr.rel (0) target = $region53
  $region52: #{mlp_discriminator_forward.1} parent=0 // pred_region
    _
  $region53: #{mlp_discriminator_forward.1} parent=0 // pred_fallthru
    _
  // Predicated region
  $region54: #{mlp_discriminator_forward.1} parent=0 // pred_check
    _
  $region55: #{mlp_discriminator_forward.1} parent=0 // pred_check_branch
    %51 = sbr.rel (0) target = $region57
  $region56: #{mlp_discriminator_forward.1} parent=0 // pred_region
    _
  $region57: #{mlp_discriminator_forward.1} parent=0 // pred_fallthru
    _
  // Predicated region
  $region58: #{mlp_discriminator_forward.1} parent=0 // pred_check
    _
  $region59: #{mlp_discriminator_forward.1} parent=0 // pred_check_branch
    %53 = sbr.rel (0) target = $region61
  $region60: #{mlp_discriminator_forward.1} parent=0 // pred_region
    _
  $region61: #{mlp_discriminator_forward.1} parent=0 // pred_fallthru
    _
  // Predicated region
  $region62: #{mlp_discriminator_forward.1} parent=0 // pred_check
    _
  $region63: #{mlp_discriminator_forward.1} parent=0 // pred_check_branch
    %55 = sbr.rel (0) target = $region65
  $region64: #{mlp_discriminator_forward.1} parent=0 // pred_region
    _
  $region65: #{mlp_discriminator_forward.1} parent=0 // pred_fallthru
    _
  // Predicated region
  $region66: #{mlp_discriminator_forward.1} parent=0 // pred_check
    _
  $region67: #{mlp_discriminator_forward.1} parent=0 // pred_check_branch
    %57 = sbr.rel (0) target = $region69
  $region68: #{mlp_discriminator_forward.1} parent=0 // pred_region
    _
  $region69: #{mlp_discriminator_forward.1} parent=0 // pred_fallthru
    _
  %v59 = vld [vmem:[%s0] sm:$0xff]
  %v60 = vpack.c.bf16 %v59, %v59
  %v61 = vld [vmem:[%s2] sm:$0xff]
  %v62 = vld [vmem:[%s2 + $0x8] sm:$0xff]
  %v63 = vld [vmem:[%s2 + $0x10] sm:$0x33]
  %v64 = vld [vmem:[%s3] sm:$0x3]
  %v66 = vlaneseq
  %v67 = vshrl.u32 %v66, 7
  %v68 = vsub.s32 0, %v67
  %v69 = vrot.slane %v64, %v68
  %v70 = vlaneseq
  %v71 = vshrl.u32 %v70, 7
  %v72 = vsub.s32 1, %v71
  %v73 = vrot.slane %v64, %v72
  %v79 = vunpack.c.l.b16 %v61
  %v80 = vunpack.c.h.b16 %v61
  %v81 = vunpack.c.l.b16 %v62
  %v82 = vunpack.c.h.b16 %v62
  %v83 = vunpack.c.l.b16 %v63
  %v84 = vunpack.c.h.b16 %v63
  %v85 = vpack.c.b16 %v81, %v79
  %v86 = vpack.c.b16 %v82, %v80
  %v87 = vpack.c.b16 %v83, %v83
  %v88 = vpack.c.b16 %v84, %v84
  %vm91 = vcmask 162816
  %v93 = vsel %vm91, %v60, 0
  %vm95 = vcmask 1041408
  %v97 = vsel %vm95, %v87, 0
  %v100 = vsel %vm95, %v88, 0
  %102 = vmatprep.subr.bf16.mxu0 %v86
  %103 = vmatpush1.bf16.msra.mxu0 %v85
  %104 = vmatprep.subr.bf16.mxu0 %v100
  %105 = vmatpush1.bf16.msra.mxu0 %v97
  %106 = vmatprep.subr.bf16.mxu0 0
  %107 = vmatpush1.bf16.msra.mxu0 0
  %108 = vmatprep.subr.bf16.mxu0 0
  %109 = vmatpush1.bf16.msra.mxu0 0
  %110 = vmatprep.subr.bf16.mxu0 0
  %111 = vmatpush1.bf16.msra.mxu0 0
  %112 = vmatprep.subr.bf16.mxu0 0
  %113 = vmatpush1.bf16.msra.mxu0 0
  %114 = vmatprep.subr.bf16.mxu0 0
  %115 = vmatpush1.bf16.msra.mxu0 0
  %116 = vmatprep.subr.bf16.mxu0 0
  %117 = vmatpush1.bf16.msra.mxu0 0
  %118 = vmatprep.subr.bf16.mxu0 0
  %119 = vmatpush1.bf16.msra.mxu0 0
  %120 = vmatprep.subr.bf16.mxu0 0
  %121 = vmatpush1.bf16.msra.mxu0 0
  %122 = vmatprep.subr.bf16.mxu0 0
  %123 = vmatpush1.bf16.msra.mxu0 0
  %124 = vmatprep.subr.bf16.mxu0 0
  %125 = vmatpush1.bf16.msra.mxu0 0
  %126 = vmatprep.subr.bf16.mxu0 0
  %127 = vmatpush1.bf16.msra.mxu0 0
  %128 = vmatprep.subr.bf16.mxu0 0
  %129 = vmatpush1.bf16.msra.mxu0 0
  %130 = vmatprep.subr.bf16.mxu0 0
  %131 = vmatpush1.bf16.msra.mxu0 0
  %132 = vmatprep.subr.bf16.mxu0 0
  %133 = vmatpush1.bf16.msra.mxu0 0
  %134 = vmatprep.mubr.bf16.mxu0 0
  %135 = vmatmul.mubr.bf16.gmra.mrb[0].mxu0 %v93
  %v136 = vpop.f32.mrb[0].mxu0
  %v137 = vadd.f32 %v69, %v136
  %v138 = vpop.f32.mrb[0].mxu0
  %v139 = vadd.f32 %v73, %v138
  %v140 = vpop.f32.mrb[0].mxu0
  %v141 = vpop.f32.mrb[0].mxu0
  %142 = vdwg.mxu0
  %vm143 = vcmp.gt.f32.partialorder %v137, 0.0
  %vm144 = vcmp.gt.f32.partialorder %v139, 0.0
  %v145 = vmul.f32 %v137, 0.2
  %v146 = vmul.f32 %v139, 0.2
  %v147 = vsel %vm143, %v137, %v145
  %v148 = vsel %vm144, %v139, %v146
  %v149 = vpack.c.bf16 %v147, %v147
  %v150 = vpack.c.bf16 %v148, %v148
  %v151 = vld [vmem:[%s4] sm:$0xf]
  %v152 = vld [vmem:[%s4 + $0x4] sm:$0xf]
  %v153 = vld [vmem:[%s4 + $0x8] sm:$0xf]
  %v154 = vld [vmem:[%s4 + $0xc] sm:$0xf]
  %v155 = vld [vmem:[%s4 + $0x10] sm:$0xf]
  %v156 = vld [vmem:[%s4 + $0x14] sm:$0xf]
  %v157 = vld [vmem:[%s4 + $0x18] sm:$0xf]
  %v158 = vld [vmem:[%s4 + $0x1c] sm:$0xf]
  %v159 = vld [vmem:[%s4 + $0x20] sm:$0xf]
  %v160 = vld [vmem:[%s4 + $0x24] sm:$0xf]
  %v161 = vld [vmem:[%s4 + $0x28] sm:$0xf]
  %v162 = vld [vmem:[%s4 + $0x2c] sm:$0xf]
  %v163 = vld [vmem:[%s4 + $0x30] sm:$0xf]
  %v164 = vld [vmem:[%s4 + $0x34] sm:$0xf]
  %v165 = vld [vmem:[%s4 + $0x38] sm:$0xf]
  %v166 = vld [vmem:[%s4 + $0x3c] sm:$0xf]
  %v167 = vld [vmem:[%s4 + $0x40] sm:$0xf]
  %v168 = vld [vmem:[%s4 + $0x44] sm:$0xf]
  %v169 = vld [vmem:[%s4 + $0x48] sm:$0xf]
  %v170 = vld [vmem:[%s4 + $0x4c] sm:$0xf]
  %v171 = vld [vmem:[%s4 + $0x50] sm:$0xf]
  %v172 = vld [vmem:[%s4 + $0x54] sm:$0xf]
  %v173 = vld [vmem:[%s4 + $0x58] sm:$0xf]
  %v174 = vld [vmem:[%s4 + $0x5c] sm:$0xf]
  %v175 = vld [vmem:[%s4 + $0x60] sm:$0xf]
  %v176 = vld [vmem:[%s4 + $0x64] sm:$0xf]
  %v177 = vld [vmem:[%s4 + $0x68] sm:$0xf]
  %v178 = vld [vmem:[%s4 + $0x6c] sm:$0xf]
  %v179 = vld [vmem:[%s4 + $0x70] sm:$0xf]
  %v180 = vld [vmem:[%s4 + $0x74] sm:$0xf]
  %v181 = vld [vmem:[%s4 + $0x78] sm:$0xf]
  %v182 = vld [vmem:[%s4 + $0x7c] sm:$0xf]
  %v183 = vld [vmem:[%s5] sm:$0x1]
  %v185 = vlaneseq
  %v186 = vshrl.u32 %v185, 7
  %v187 = vsub.s32 0, %v186
  %v188 = vrot.slane %v183, %v187
  %v222 = vunpack.c.l.b16 %v151
  %v223 = vunpack.c.l.b16 %v152
  %v224 = vunpack.c.l.b16 %v153
  %v225 = vunpack.c.l.b16 %v154
  %v226 = vunpack.c.l.b16 %v155
  %v227 = vunpack.c.l.b16 %v156
  %v228 = vunpack.c.l.b16 %v157
  %v229 = vunpack.c.l.b16 %v158
  %v230 = vunpack.c.l.b16 %v159
  %v231 = vunpack.c.l.b16 %v160
  %v232 = vunpack.c.l.b16 %v161
  %v233 = vunpack.c.l.b16 %v162
  %v234 = vunpack.c.l.b16 %v163
  %v235 = vunpack.c.l.b16 %v164
  %v236 = vunpack.c.l.b16 %v165
  %v237 = vunpack.c.l.b16 %v166
  %v238 = vunpack.c.l.b16 %v167
  %v239 = vunpack.c.l.b16 %v168
  %v240 = vunpack.c.l.b16 %v169
  %v241 = vunpack.c.l.b16 %v170
  %v242 = vunpack.c.l.b16 %v171
  %v243 = vunpack.c.l.b16 %v172
  %v244 = vunpack.c.l.b16 %v173
  %v245 = vunpack.c.l.b16 %v174
  %v246 = vunpack.c.l.b16 %v175
  %v247 = vunpack.c.l.b16 %v176
  %v248 = vunpack.c.l.b16 %v177
  %v249 = vunpack.c.l.b16 %v178
  %v250 = vunpack.c.l.b16 %v179
  %v251 = vunpack.c.l.b16 %v180
  %v252 = vunpack.c.l.b16 %v181
  %v253 = vunpack.c.l.b16 %v182
  %v254 = vpack.c.b16 %v223, %v222
  %v255 = vpack.c.b16 %v225, %v224
  %v256 = vpack.c.b16 %v227, %v226
  %v257 = vpack.c.b16 %v229, %v228
  %v258 = vpack.c.b16 %v231, %v230
  %v259 = vpack.c.b16 %v233, %v232
  %v260 = vpack.c.b16 %v235, %v234
  %v261 = vpack.c.b16 %v237, %v236
  %v262 = vpack.c.b16 %v239, %v238
  %v263 = vpack.c.b16 %v241, %v240
  %v264 = vpack.c.b16 %v243, %v242
  %v265 = vpack.c.b16 %v245, %v244
  %v266 = vpack.c.b16 %v247, %v246
  %v267 = vpack.c.b16 %v249, %v248
  %v268 = vpack.c.b16 %v251, %v250
  %v269 = vpack.c.b16 %v253, %v252
  %286 = vmatprep.subr.bf16.mxu0 0
  %287 = vmatpush1.bf16.msra.mxu0 %v254
  %288 = vmatprep.subr.bf16.mxu0 0
  %289 = vmatpush1.bf16.msra.mxu0 %v255
  %290 = vmatprep.subr.bf16.mxu0 0
  %291 = vmatpush1.bf16.msra.mxu0 %v256
  %292 = vmatprep.subr.bf16.mxu0 0
  %293 = vmatpush1.bf16.msra.mxu0 %v257
  %294 = vmatprep.subr.bf16.mxu0 0
  %295 = vmatpush1.bf16.msra.mxu0 %v258
  %296 = vmatprep.subr.bf16.mxu0 0
  %297 = vmatpush1.bf16.msra.mxu0 %v259
  %298 = vmatprep.subr.bf16.mxu0 0
  %299 = vmatpush1.bf16.msra.mxu0 %v260
  %300 = vmatprep.subr.bf16.mxu0 0
  %301 = vmatpush1.bf16.msra.mxu0 %v261
  %302 = vmatprep.subr.bf16.mxu0 0
  %303 = vmatpush1.bf16.msra.mxu0 %v262
  %304 = vmatprep.subr.bf16.mxu0 0
  %305 = vmatpush1.bf16.msra.mxu0 %v263
  %306 = vmatprep.subr.bf16.mxu0 0
  %307 = vmatpush1.bf16.msra.mxu0 %v264
  %308 = vmatprep.subr.bf16.mxu0 0
  %309 = vmatpush1.bf16.msra.mxu0 %v265
  %310 = vmatprep.subr.bf16.mxu0 0
  %311 = vmatpush1.bf16.msra.mxu0 %v266
  %312 = vmatprep.subr.bf16.mxu0 0
  %313 = vmatpush1.bf16.msra.mxu0 %v267
  %314 = vmatprep.subr.bf16.mxu0 0
  %315 = vmatpush1.bf16.msra.mxu0 %v268
  %316 = vmatprep.subr.bf16.mxu0 0
  %317 = vmatpush1.bf16.msra.mxu0 %v269
  %318 = vmatprep.mubr.bf16.mxu0 %v150
  %319 = vmatmul.mubr.bf16.gmra.mrb[0].mxu0 %v149
  %v320 = vpop.f32.mrb[0].mxu0
  %v321 = vadd.f32 %v188, %v320
  %v322 = vpop.f32.mrb[0].mxu0
  %v323 = vpop.f32.mrb[0].mxu0
  %v324 = vpop.f32.mrb[0].mxu0
  %325 = vdwg.mxu0
  %vm326 = vcmp.gt.f32.partialorder %v321, 0.0
  %v327 = vmul.f32 %v321, 0.2
  %v328 = vsel %vm326, %v321, %v327
  %v329 = vpack.c.bf16 %v328, %v328
  %v330 = vld [vmem:[%s6] sm:$0xf]
  %v331 = vld [vmem:[%s6 + $0x4] sm:$0xf]
  %v332 = vld [vmem:[%s6 + $0x8] sm:$0xf]
  %v333 = vld [vmem:[%s6 + $0xc] sm:$0xf]
  %v334 = vld [vmem:[%s6 + $0x10] sm:$0xf]
  %v335 = vld [vmem:[%s6 + $0x14] sm:$0xf]
  %v336 = vld [vmem:[%s6 + $0x18] sm:$0xf]
  %v337 = vld [vmem:[%s6 + $0x1c] sm:$0xf]
  %v338 = vld [vmem:[%s6 + $0x20] sm:$0xf]
  %v339 = vld [vmem:[%s6 + $0x24] sm:$0xf]
  %v340 = vld [vmem:[%s6 + $0x28] sm:$0xf]
  %v341 = vld [vmem:[%s6 + $0x2c] sm:$0xf]
  %v342 = vld [vmem:[%s6 + $0x30] sm:$0xf]
  %v343 = vld [vmem:[%s6 + $0x34] sm:$0xf]
  %v344 = vld [vmem:[%s6 + $0x38] sm:$0xf]
  %v345 = vld [vmem:[%s6 + $0x3c] sm:$0xf]
  %v346 = vld [vmem:[%s7] sm:$0x1]
  %v348 = vlaneseq
  %v349 = vshrl.u32 %v348, 7
  %v350 = vsub.s32 0, %v349
  %v351 = vrot.slane %v346, %v350
  %v369 = vunpack.c.l.b16 %v330
  %v370 = vunpack.c.l.b16 %v331
  %v371 = vunpack.c.l.b16 %v332
  %v372 = vunpack.c.l.b16 %v333
  %v373 = vunpack.c.l.b16 %v334
  %v374 = vunpack.c.l.b16 %v335
  %v375 = vunpack.c.l.b16 %v336
  %v376 = vunpack.c.l.b16 %v337
  %v377 = vunpack.c.l.b16 %v338
  %v378 = vunpack.c.l.b16 %v339
  %v379 = vunpack.c.l.b16 %v340
  %v380 = vunpack.c.l.b16 %v341
  %v381 = vunpack.c.l.b16 %v342
  %v382 = vunpack.c.l.b16 %v343
  %v383 = vunpack.c.l.b16 %v344
  %v384 = vunpack.c.l.b16 %v345
  %v385 = vpack.c.b16 %v370, %v369
  %v386 = vpack.c.b16 %v372, %v371
  %v387 = vpack.c.b16 %v374, %v373
  %v388 = vpack.c.b16 %v376, %v375
  %v389 = vpack.c.b16 %v378, %v377
  %v390 = vpack.c.b16 %v380, %v379
  %v391 = vpack.c.b16 %v382, %v381
  %v392 = vpack.c.b16 %v384, %v383
  %401 = vmatprep.subr.bf16.mxu0 0
  %402 = vmatpush1.bf16.msra.mxu0 %v385
  %403 = vmatprep.subr.bf16.mxu0 0
  %404 = vmatpush1.bf16.msra.mxu0 %v386
  %405 = vmatprep.subr.bf16.mxu0 0
  %406 = vmatpush1.bf16.msra.mxu0 %v387
  %407 = vmatprep.subr.bf16.mxu0 0
  %408 = vmatpush1.bf16.msra.mxu0 %v388
  %409 = vmatprep.subr.bf16.mxu0 0
  %410 = vmatpush1.bf16.msra.mxu0 %v389
  %411 = vmatprep.subr.bf16.mxu0 0
  %412 = vmatpush1.bf16.msra.mxu0 %v390
  %413 = vmatprep.subr.bf16.mxu0 0
  %414 = vmatpush1.bf16.msra.mxu0 %v391
  %415 = vmatprep.subr.bf16.mxu0 0
  %416 = vmatpush1.bf16.msra.mxu0 %v392
  %417 = vmatprep.subr.bf16.mxu0 0
  %418 = vmatpush1.bf16.msra.mxu0 0
  %419 = vmatprep.subr.bf16.mxu0 0
  %420 = vmatpush1.bf16.msra.mxu0 0
  %421 = vmatprep.subr.bf16.mxu0 0
  %422 = vmatpush1.bf16.msra.mxu0 0
  %423 = vmatprep.subr.bf16.mxu0 0
  %424 = vmatpush1.bf16.msra.mxu0 0
  %425 = vmatprep.subr.bf16.mxu0 0
  %426 = vmatpush1.bf16.msra.mxu0 0
  %427 = vmatprep.subr.bf16.mxu0 0
  %428 = vmatpush1.bf16.msra.mxu0 0
  %429 = vmatprep.subr.bf16.mxu0 0
  %430 = vmatpush1.bf16.msra.mxu0 0
  %431 = vmatprep.subr.bf16.mxu0 0
  %432 = vmatpush1.bf16.msra.mxu0 0
  %433 = vmatprep.mubr.bf16.mxu0 0
  %434 = vmatmul.mubr.bf16.gmra.mrb[0].mxu0 %v329
  %v435 = vpop.f32.mrb[0].mxu0
  %v436 = vadd.f32 %v351, %v435
  %v437 = vpop.f32.mrb[0].mxu0
  %v438 = vpop.f32.mrb[0].mxu0
  %v439 = vpop.f32.mrb[0].mxu0
  %440 = vdwg.mxu0
  %vm441 = vcmp.gt.f32.partialorder %v436, 0.0
  %v442 = vmul.f32 %v436, 0.2
  %v443 = vsel %vm441, %v436, %v442
  %v444 = vld [vmem:[%s8] sm:$0xf]
  %v445 = vpack.c.bf16 %v443, %v443
  %v446 = vld [vmem:[%s1] sm:$0xff]
  %v447 = vld [vmem:[%s1 + $0x8] sm:$0xff]
  %v448 = vld [vmem:[%s1 + $0x10] sm:$0xff]
  %v449 = vld [vmem:[%s1 + $0x18] sm:$0xff]
  %v450 = vpack.c.bf16 %v447, %v446
  %v451 = vpack.c.bf16 %v449, %v448
  %v452 = vld [vmem:[%s9] sm:$0xf]
  %v453 = vld [vmem:[%s9 + $0x4] sm:$0xf]
  %v456 = vunpack.c.l.b16 %v452
  %v457 = vunpack.c.l.b16 %v453
  %v458 = vpack.c.b16 %v457, %v456
  %vm460 = vcmask 130048
  %v462 = vsel %vm460, %v450, 0
  %v465 = vsel %vm460, %v451, 0
  %467 = vmatprep.subr.bf16.mxu0 0
  %468 = vmatpush1.bf16.msra.mxu0 %v458
  %469 = vmatprep.subr.bf16.mxu0 0
  %470 = vmatpush1.bf16.msra.mxu0 0
  %471 = vmatprep.subr.bf16.mxu0 0
  %472 = vmatpush1.bf16.msra.mxu0 0
  %473 = vmatprep.subr.bf16.mxu0 0
  %474 = vmatpush1.bf16.msra.mxu0 0
  %475 = vmatprep.subr.bf16.mxu0 0
  %476 = vmatpush1.bf16.msra.mxu0 0
  %477 = vmatprep.subr.bf16.mxu0 0
  %478 = vmatpush1.bf16.msra.mxu0 0
  %479 = vmatprep.subr.bf16.mxu0 0
  %480 = vmatpush1.bf16.msra.mxu0 0
  %481 = vmatprep.subr.bf16.mxu0 0
  %482 = vmatpush1.bf16.msra.mxu0 0
  %483 = vmatprep.subr.bf16.mxu0 0
  %484 = vmatpush1.bf16.msra.mxu0 0
  %485 = vmatprep.subr.bf16.mxu0 0
  %486 = vmatpush1.bf16.msra.mxu0 0
  %487 = vmatprep.subr.bf16.mxu0 0
  %488 = vmatpush1.bf16.msra.mxu0 0
  %489 = vmatprep.subr.bf16.mxu0 0
  %490 = vmatpush1.bf16.msra.mxu0 0
  %491 = vmatprep.subr.bf16.mxu0 0
  %492 = vmatpush1.bf16.msra.mxu0 0
  %493 = vmatprep.subr.bf16.mxu0 0
  %494 = vmatpush1.bf16.msra.mxu0 0
  %495 = vmatprep.subr.bf16.mxu0 0
  %496 = vmatpush1.bf16.msra.mxu0 0
  %497 = vmatprep.subr.bf16.mxu0 0
  %498 = vmatpush1.bf16.msra.mxu0 0
  %499 = vmatprep.mubr.bf16.mxu0 0
  %500 = vmatmul.mubr.bf16.gmra.mrb[0].mxu0 %v462
  %v501 = vpop.f32.mrb[0].mxu0
  %v502 = vadd.f32 0.0, %v501
  %v503 = vpop.f32.mrb[0].mxu0
  %v504 = vpop.f32.mrb[0].mxu0
  %v505 = vadd.f32 0.0, %v504
  %v506 = vpop.f32.mrb[0].mxu0
  %507 = vmatprep.mubr.bf16.mxu0 0
  %508 = vmatmul.mubr.bf16.gmra.mrb[0].mxu0 %v465
  %v509 = vpop.f32.mrb[0].mxu0
  %v510 = vadd.f32 0.0, %v509
  %v511 = vpop.f32.mrb[0].mxu0
  %v512 = vpop.f32.mrb[0].mxu0
  %v513 = vadd.f32 0.0, %v512
  %v514 = vpop.f32.mrb[0].mxu0
  %515 = vdwg.mxu0
  %v516 = vld [vmem:[%s10] sm:$0x1]
  %v517 = vld [vmem:[%s10 + $0x1] sm:$0x1]
  %v518 = vld [vmem:[%s10 + $0x2] sm:$0x1]
  %v519 = vld [vmem:[%s10 + $0x3] sm:$0x1]
  %v524 = vlaneseq
  %v525 = vshrl.u32 %v524, 7
  %v526 = vsub.s32 0, %v525
  %v527 = vrot.slane %v516, %v526
  %v528 = vlaneseq
  %v529 = vshrl.u32 %v528, 7
  %v530 = vsub.s32 0, %v529
  %v531 = vrot.slane %v517, %v530
  %v532 = vlaneseq
  %v533 = vshrl.u32 %v532, 7
  %v534 = vsub.s32 0, %v533
  %v535 = vrot.slane %v518, %v534
  %v536 = vlaneseq
  %v537 = vshrl.u32 %v536, 7
  %v538 = vsub.s32 0, %v537
  %v539 = vrot.slane %v519, %v538
  %v544 = vadd.f32 %v502, %v527
  %v545 = vadd.f32 %v505, %v531
  %v546 = vadd.f32 %v510, %v535
  %v547 = vadd.f32 %v513, %v539
  %vm548 = vcmp.gt.f32.partialorder %v544, 0.0
  %vm549 = vcmp.gt.f32.partialorder %v545, 0.0
  %vm550 = vcmp.gt.f32.partialorder %v546, 0.0
  %vm551 = vcmp.gt.f32.partialorder %v547, 0.0
  %v552 = vmul.f32 %v544, 0.2
  %v553 = vmul.f32 %v545, 0.2
  %v554 = vmul.f32 %v546, 0.2
  %v555 = vmul.f32 %v547, 0.2
  %v556 = vsel %vm548, %v544, %v552
  %v557 = vsel %vm549, %v545, %v553
  %v558 = vsel %vm550, %v546, %v554
  %v559 = vsel %vm551, %v547, %v555
  %v560 = vpack.c.bf16 %v557, %v556
  %v561 = vpack.c.bf16 %v559, %v558
  %v562 = vld [vmem:[%s11] sm:$0xf]
  %v563 = vld [vmem:[%s11 + $0x4] sm:$0xf]
  %v564 = vld [vmem:[%s11 + $0x8] sm:$0xf]
  %v565 = vld [vmem:[%s11 + $0xc] sm:$0xf]
  %v566 = vld [vmem:[%s11 + $0x10] sm:$0xf]
  %v567 = vld [vmem:[%s11 + $0x14] sm:$0xf]
  %v568 = vld [vmem:[%s11 + $0x18] sm:$0xf]
  %v569 = vld [vmem:[%s11 + $0x1c] sm:$0xf]
  %v570 = vld [vmem:[%s11 + $0x20] sm:$0xf]
  %v571 = vld [vmem:[%s11 + $0x24] sm:$0xf]
  %v572 = vld [vmem:[%s11 + $0x28] sm:$0xf]
  %v573 = vld [vmem:[%s11 + $0x2c] sm:$0xf]
  %v574 = vld [vmem:[%s11 + $0x30] sm:$0xf]
  %v575 = vld [vmem:[%s11 + $0x34] sm:$0xf]
  %v576 = vld [vmem:[%s11 + $0x38] sm:$0xf]
  %v577 = vld [vmem:[%s11 + $0x3c] sm:$0xf]
  %v578 = vld [vmem:[%s12] sm:$0x1]
  %v580 = vlaneseq
  %v581 = vshrl.u32 %v580, 7
  %v582 = vsub.s32 0, %v581
  %v583 = vrot.slane %v578, %v582
  %v601 = vunpack.c.l.b16 %v562
  %v602 = vunpack.c.l.b16 %v563
  %v603 = vunpack.c.l.b16 %v564
  %v604 = vunpack.c.l.b16 %v565
  %v605 = vunpack.c.l.b16 %v566
  %v606 = vunpack.c.l.b16 %v567
  %v607 = vunpack.c.l.b16 %v568
  %v608 = vunpack.c.l.b16 %v569
  %v609 = vunpack.c.l.b16 %v570
  %v610 = vunpack.c.l.b16 %v571
  %v611 = vunpack.c.l.b16 %v572
  %v612 = vunpack.c.l.b16 %v573
  %v613 = vunpack.c.l.b16 %v574
  %v614 = vunpack.c.l.b16 %v575
  %v615 = vunpack.c.l.b16 %v576
  %v616 = vunpack.c.l.b16 %v577
  %v617 = vpack.c.b16 %v602, %v601
  %v618 = vpack.c.b16 %v604, %v603
  %v619 = vpack.c.b16 %v606, %v605
  %v620 = vpack.c.b16 %v608, %v607
  %v621 = vpack.c.b16 %v610, %v609
  %v622 = vpack.c.b16 %v612, %v611
  %v623 = vpack.c.b16 %v614, %v613
  %v624 = vpack.c.b16 %v616, %v615
  %633 = vmatprep.subr.bf16.mxu0 0
  %634 = vmatpush1.bf16.msra.mxu0 %v617
  %635 = vmatprep.subr.bf16.mxu0 0
  %636 = vmatpush1.bf16.msra.mxu0 %v618
  %637 = vmatprep.subr.bf16.mxu0 0
  %638 = vmatpush1.bf16.msra.mxu0 %v619
  %639 = vmatprep.subr.bf16.mxu0 0
  %640 = vmatpush1.bf16.msra.mxu0 %v620
  %641 = vmatprep.subr.bf16.mxu0 0
  %642 = vmatpush1.bf16.msra.mxu0 %v621
  %643 = vmatprep.subr.bf16.mxu0 0
  %644 = vmatpush1.bf16.msra.mxu0 %v622
  %645 = vmatprep.subr.bf16.mxu0 0
  %646 = vmatpush1.bf16.msra.mxu0 %v623
  %647 = vmatprep.subr.bf16.mxu0 0
  %648 = vmatpush1.bf16.msra.mxu0 %v624
  %649 = vmatprep.subr.bf16.mxu0 0
  %650 = vmatpush1.bf16.msra.mxu0 0
  %651 = vmatprep.subr.bf16.mxu0 0
  %652 = vmatpush1.bf16.msra.mxu0 0
  %653 = vmatprep.subr.bf16.mxu0 0
  %654 = vmatpush1.bf16.msra.mxu0 0
  %655 = vmatprep.subr.bf16.mxu0 0
  %656 = vmatpush1.bf16.msra.mxu0 0
  %657 = vmatprep.subr.bf16.mxu0 0
  %658 = vmatpush1.bf16.msra.mxu0 0
  %659 = vmatprep.subr.bf16.mxu0 0
  %660 = vmatpush1.bf16.msra.mxu0 0
  %661 = vmatprep.subr.bf16.mxu0 0
  %662 = vmatpush1.bf16.msra.mxu0 0
  %663 = vmatprep.subr.bf16.mxu0 0
  %664 = vmatpush1.bf16.msra.mxu0 0
  %665 = vmatprep.mubr.bf16.mxu0 0
  %666 = vmatmul.mubr.bf16.gmra.mrb[0].mxu0 %v560
  %v667 = vpop.f32.mrb[0].mxu0
  %v668 = vadd.f32 %v583, %v667
  %v669 = vpop.f32.mrb[0].mxu0
  %v670 = vpop.f32.mrb[0].mxu0
  %v671 = vadd.f32 %v583, %v670
  %v672 = vpop.f32.mrb[0].mxu0
  %673 = vmatprep.mubr.bf16.mxu0 0
  %674 = vmatmul.mubr.bf16.gmra.mrb[0].mxu0 %v561
  %v675 = vpop.f32.mrb[0].mxu0
  %v676 = vadd.f32 %v583, %v675
  %v677 = vpop.f32.mrb[0].mxu0
  %v678 = vpop.f32.mrb[0].mxu0
  %v679 = vadd.f32 %v583, %v678
  %v680 = vpop.f32.mrb[0].mxu0
  %681 = vdwg.mxu0
  %vm682 = vcmp.gt.f32.partialorder %v668, 0.0
  %vm683 = vcmp.gt.f32.partialorder %v671, 0.0
  %vm684 = vcmp.gt.f32.partialorder %v676, 0.0
  %vm685 = vcmp.gt.f32.partialorder %v679, 0.0
  %v686 = vmul.f32 %v668, 0.2
  %v687 = vmul.f32 %v671, 0.2
  %v688 = vmul.f32 %v676, 0.2
  %v689 = vmul.f32 %v679, 0.2
  %v690 = vsel %vm682, %v668, %v686
  %v691 = vsel %vm683, %v671, %v687
  %v692 = vsel %vm684, %v676, %v688
  %v693 = vsel %vm685, %v679, %v689
  %v694 = vpack.c.bf16 %v691, %v690
  %v695 = vpack.c.bf16 %v693, %v692
  %v696 = vld [vmem:[%s13] sm:$0xf]
  %v697 = vld [vmem:[%s13 + $0x4] sm:$0xf]
  %v698 = vld [vmem:[%s13 + $0x8] sm:$0xf]
  %v699 = vld [vmem:[%s13 + $0xc] sm:$0xf]
  %v700 = vld [vmem:[%s13 + $0x10] sm:$0xf]
  %v701 = vld [vmem:[%s13 + $0x14] sm:$0xf]
  %v702 = vld [vmem:[%s13 + $0x18] sm:$0xf]
  %v703 = vld [vmem:[%s13 + $0x1c] sm:$0xf]
  %v704 = vld [vmem:[%s14] sm:$0x1]
  %v706 = vlaneseq
  %v707 = vshrl.u32 %v706, 7
  %v708 = vsub.s32 0, %v707
  %v709 = vrot.slane %v704, %v708
  %v719 = vunpack.c.l.b16 %v696
  %v720 = vunpack.c.l.b16 %v697
  %v721 = vunpack.c.l.b16 %v698
  %v722 = vunpack.c.l.b16 %v699
  %v723 = vunpack.c.l.b16 %v700
  %v724 = vunpack.c.l.b16 %v701
  %v725 = vunpack.c.l.b16 %v702
  %v726 = vunpack.c.l.b16 %v703
  %v727 = vpack.c.b16 %v720, %v719
  %v728 = vpack.c.b16 %v722, %v721
  %v729 = vpack.c.b16 %v724, %v723
  %v730 = vpack.c.b16 %v726, %v725
  %vm735 = vcmask 523264
  %v737 = vsel %vm735, %v694, 0
  %v740 = vsel %vm735, %v695, 0
  %742 = vmatprep.subr.bf16.mxu0 0
  %743 = vmatpush1.bf16.msra.mxu0 %v727
  %744 = vmatprep.subr.bf16.mxu0 0
  %745 = vmatpush1.bf16.msra.mxu0 %v728
  %746 = vmatprep.subr.bf16.mxu0 0
  %747 = vmatpush1.bf16.msra.mxu0 %v729
  %748 = vmatprep.subr.bf16.mxu0 0
  %749 = vmatpush1.bf16.msra.mxu0 %v730
  %750 = vmatprep.subr.bf16.mxu0 0
  %751 = vmatpush1.bf16.msra.mxu0 0
  %752 = vmatprep.subr.bf16.mxu0 0
  %753 = vmatpush1.bf16.msra.mxu0 0
  %754 = vmatprep.subr.bf16.mxu0 0
  %755 = vmatpush1.bf16.msra.mxu0 0
  %756 = vmatprep.subr.bf16.mxu0 0
  %757 = vmatpush1.bf16.msra.mxu0 0
  %758 = vmatprep.subr.bf16.mxu0 0
  %759 = vmatpush1.bf16.msra.mxu0 0
  %760 = vmatprep.subr.bf16.mxu0 0
  %761 = vmatpush1.bf16.msra.mxu0 0
  %762 = vmatprep.subr.bf16.mxu0 0
  %763 = vmatpush1.bf16.msra.mxu0 0
  %764 = vmatprep.subr.bf16.mxu0 0
  %765 = vmatpush1.bf16.msra.mxu0 0
  %766 = vmatprep.subr.bf16.mxu0 0
  %767 = vmatpush1.bf16.msra.mxu0 0
  %768 = vmatprep.subr.bf16.mxu0 0
  %769 = vmatpush1.bf16.msra.mxu0 0
  %770 = vmatprep.subr.bf16.mxu0 0
  %771 = vmatpush1.bf16.msra.mxu0 0
  %772 = vmatprep.subr.bf16.mxu0 0
  %773 = vmatpush1.bf16.msra.mxu0 0
  %774 = vmatprep.mubr.bf16.mxu0 0
  %775 = vmatmul.mubr.bf16.gmra.mrb[0].mxu0 %v737
  %v776 = vpop.f32.mrb[0].mxu0
  %v777 = vadd.f32 %v709, %v776
  %v778 = vpop.f32.mrb[0].mxu0
  %v779 = vpop.f32.mrb[0].mxu0
  %v780 = vadd.f32 %v709, %v779
  %v781 = vpop.f32.mrb[0].mxu0
  %782 = vmatprep.mubr.bf16.mxu0 0
  %783 = vmatmul.mubr.bf16.gmra.mrb[0].mxu0 %v740
  %v784 = vpop.f32.mrb[0].mxu0
  %v785 = vadd.f32 %v709, %v784
  %v786 = vpop.f32.mrb[0].mxu0
  %v787 = vpop.f32.mrb[0].mxu0
  %v788 = vadd.f32 %v709, %v787
  %v789 = vpop.f32.mrb[0].mxu0
  %790 = vdwg.mxu0
  %vm791 = vcmp.gt.f32.partialorder %v777, 0.0
  %vm792 = vcmp.gt.f32.partialorder %v780, 0.0
  %vm793 = vcmp.gt.f32.partialorder %v785, 0.0
  %vm794 = vcmp.gt.f32.partialorder %v788, 0.0
  %v795 = vmul.f32 %v777, 0.2
  %v796 = vmul.f32 %v780, 0.2
  %v797 = vmul.f32 %v785, 0.2
  %v798 = vmul.f32 %v788, 0.2
  %v799 = vsel %vm791, %v777, %v795
  %v800 = vsel %vm792, %v780, %v796
  %v801 = vsel %vm793, %v785, %v797
  %v802 = vsel %vm794, %v788, %v798
  %v803 = vadd.f32 %v799, %v800
  %v804 = vadd.f32 %v803, %v801
  %v805 = vadd.f32 %v804, %v802
  %v806 = vmul.f32 %v805, 0.25
  %v807 = vld [vmem:[%s15] sm:$0xf]
  %v808 = vpack.c.bf16 %v806, %v806
  %vm809 = vcmask 261120
  %v811 = vsel %vm809, %v807, 0
  %v814 = vsel %vm809, %v808, 0
  %816 = vmatprep.subr.bf16.mxu0 0
  %817 = vmatpush1.bf16.xpose.msra.mxu0 %v814
  %818 = vmatprep.subr.bf16.mxu0 0
  %819 = vmatpush1.bf16.xpose.msra.mxu0 0
  %820 = vmatprep.subr.bf16.mxu0 0
  %821 = vmatpush1.bf16.xpose.msra.mxu0 0
  %822 = vmatprep.subr.bf16.mxu0 0
  %823 = vmatpush1.bf16.xpose.msra.mxu0 0
  %824 = vmatprep.subr.bf16.mxu0 0
  %825 = vmatpush1.bf16.xpose.msra.mxu0 0
  %826 = vmatprep.subr.bf16.mxu0 0
  %827 = vmatpush1.bf16.xpose.msra.mxu0 0
  %828 = vmatprep.subr.bf16.mxu0 0
  %829 = vmatpush1.bf16.xpose.msra.mxu0 0
  %830 = vmatprep.subr.bf16.mxu0 0
  %831 = vmatpush1.bf16.xpose.msra.mxu0 0
  %832 = vmatprep.subr.bf16.mxu0 0
  %833 = vmatpush1.bf16.xpose.msra.mxu0 0
  %834 = vmatprep.subr.bf16.mxu0 0
  %835 = vmatpush1.bf16.xpose.msra.mxu0 0
  %836 = vmatprep.subr.bf16.mxu0 0
  %837 = vmatpush1.bf16.xpose.msra.mxu0 0
  %838 = vmatprep.subr.bf16.mxu0 0
  %839 = vmatpush1.bf16.xpose.msra.mxu0 0
  %840 = vmatprep.subr.bf16.mxu0 0
  %841 = vmatpush1.bf16.xpose.msra.mxu0 0
  %842 = vmatprep.subr.bf16.mxu0 0
  %843 = vmatpush1.bf16.xpose.msra.mxu0 0
  %844 = vmatprep.subr.bf16.mxu0 0
  %845 = vmatpush1.bf16.xpose.msra.mxu0 0
  %846 = vmatprep.subr.bf16.mxu0 0
  %847 = vmatpush1.bf16.xpose.msra.mxu0 0
  %848 = vmatprep.mubr.bf16.mxu0 0
  %849 = vmatmul.mubr.bf16.gmra.mrb[0].mxu0 %v811
  %v850 = vpop.f32.mrb[0].mxu0
  %v851 = vadd.f32 0.0, %v850
  %v852 = vpop.f32.mrb[0].mxu0
  %v853 = vpop.f32.mrb[0].mxu0
  %v854 = vpop.f32.mrb[0].mxu0
  %855 = vdwg.mxu0
  %v857 = vsel %vm735, %v444, 0
  %v860 = vsel %vm735, %v445, 0
  %862 = vmatprep.subr.bf16.mxu0 0
  %863 = vmatpush1.bf16.xpose.msra.mxu0 %v860
  %864 = vmatprep.subr.bf16.mxu0 0
  %865 = vmatpush1.bf16.xpose.msra.mxu0 0
  %866 = vmatprep.subr.bf16.mxu0 0
  %867 = vmatpush1.bf16.xpose.msra.mxu0 0
  %868 = vmatprep.subr.bf16.mxu0 0
  %869 = vmatpush1.bf16.xpose.msra.mxu0 0
  %870 = vmatprep.subr.bf16.mxu0 0
  %871 = vmatpush1.bf16.xpose.msra.mxu0 0
  %872 = vmatprep.subr.bf16.mxu0 0
  %873 = vmatpush1.bf16.xpose.msra.mxu0 0
  %874 = vmatprep.subr.bf16.mxu0 0
  %875 = vmatpush1.bf16.xpose.msra.mxu0 0
  %876 = vmatprep.subr.bf16.mxu0 0
  %877 = vmatpush1.bf16.xpose.msra.mxu0 0
  %878 = vmatprep.subr.bf16.mxu0 0
  %879 = vmatpush1.bf16.xpose.msra.mxu0 0
  %880 = vmatprep.subr.bf16.mxu0 0
  %881 = vmatpush1.bf16.xpose.msra.mxu0 0
  %882 = vmatprep.subr.bf16.mxu0 0
  %883 = vmatpush1.bf16.xpose.msra.mxu0 0
  %884 = vmatprep.subr.bf16.mxu0 0
  %885 = vmatpush1.bf16.xpose.msra.mxu0 0
  %886 = vmatprep.subr.bf16.mxu0 0
  %887 = vmatpush1.bf16.xpose.msra.mxu0 0
  %888 = vmatprep.subr.bf16.mxu0 0
  %889 = vmatpush1.bf16.xpose.msra.mxu0 0
  %890 = vmatprep.subr.bf16.mxu0 0
  %891 = vmatpush1.bf16.xpose.msra.mxu0 0
  %892 = vmatprep.subr.bf16.mxu0 0
  %893 = vmatpush1.bf16.xpose.msra.mxu0 0
  %894 = vmatprep.mubr.bf16.mxu0 0
  %895 = vmatmul.mubr.bf16.gmra.mrb[0].mxu0 %v857
  %v896 = vpop.f32.mrb[0].mxu0
  %v897 = vadd.f32 %v851, %v896
  %v898 = vpop.f32.mrb[0].mxu0
  %v899 = vpop.f32.mrb[0].mxu0
  %v900 = vpop.f32.mrb[0].mxu0
  %901 = vdwg.mxu0
  %v902 = vld [vmem:[#allocation2] sm:$0x1]
  %v904 = vlaneseq
  %v905 = vshrl.u32 %v904, 7
  %v906 = vsub.s32 0, %v905
  %v907 = vrot.slane %v902, %v906
  %908 = vset.pattern.permute.xlu0 0
  %909 = vperm.xlu0 %908, %v907
  %v910 = vpop.permute.xlu0 %909
  %v912 = vadd.f32 %v897, %v910
  %vm913 = vcmask 64512
  %914 = vst.msk [vmem:[%s17] sm:$0xff] %vm913, %v912
  // Predicated region
  $region70: #{mlp_discriminator_forward.1} parent=0 // pred_check
    _
  $region71: #{mlp_discriminator_forward.1} parent=0 // pred_check_branch
    %916 = sbr.rel (0) target = $region73
  $region72: #{mlp_discriminator_forward.1} parent=0 // pred_region
    _
  $region73: #{mlp_discriminator_forward.1} parent=0 // pred_fallthru
    _
  // Predicated region
  $region74: #{mlp_discriminator_forward.1} parent=0 // pred_check
    _
  $region75: #{mlp_discriminator_forward.1} parent=0 // pred_check_branch
    %918 = sbr.rel (0) target = $region77
  $region76: #{mlp_discriminator_forward.1} parent=0 // pred_region
    _
  $region77: #{mlp_discriminator_forward.1} parent=0 // pred_fallthru
    _

</llo_original>
